<compile_context>
chip_gen: v5e
topology: v5e:2x2
jax: 0.10.0
libtpu: 0.0.40
codegen_flags: <defaults>
</compile_context>

<pallas_src>
import numpy as np

import jax
import jax.numpy as jnp
from jax.experimental import pallas as pl
from jax.experimental.pallas import tpu as pltpu


# ----------------------------- kernel ------------------------------------- #

def _fusion_kernel(h_ref, x_ref, w_h_ref, w_x_ref, b_ref, out_ref):
    x = x_ref[...]                               # (TM, E) f32 (blend needs f32)
    hb = h_ref[...].astype(jnp.bfloat16)         # bf16 MXU operand (no-op if
    xb = x.astype(jnp.bfloat16)                  # already streamed as bf16)

    # Packed matmul: columns [0:E] are the r logits, column E is the g logit,
    # remaining columns are zero padding (MXU N-lanes are idle below 128
    # anyway, so the extra gate column is free).
    acc = jnp.dot(hb, w_h_ref[...], preferred_element_type=jnp.float32)
    acc = acc + jnp.dot(xb, w_x_ref[...], preferred_element_type=jnp.float32)
    acc = acc + b_ref[...]                       # (TM, NP) f32

    E = x.shape[-1]
    r = jnp.tanh(acc[:, :E])                     # (TM, E)  EUP
    g = jax.nn.sigmoid(acc[:, E:E + 1])          # (TM, 1)  EUP

    out_ref[...] = x + g * (r - x)               # == r*g + x*(1-g)


# --------------------------- tiling helper --------------------------------- #

def _choose_row_tile(M, row_tile):
    """Pick (tm, Mp).  Prefers: no padding (tile divides M), >= 2 grid steps
    (so v7x megacore can shard the 'parallel' axis), 16-aligned tiles (bf16
    sublane packing for the streamed history rows), largest tile <= row_tile."""
    if M < 16 or M % 8 != 0:
        if M <= row_tile:
            return M, M                    # single full-array block
        tm = row_tile
        return tm, pl.cdiv(M, tm) * tm     # ragged fallback (padded)
    upper = min(row_tile, M // 2)          # cap -> always >= 2 grid steps
    for step in (16, 8):                   # prefer bf16-friendly tiles
        u = upper - upper % step
        for t in range(u, step - 1, -step):
            if M % t == 0:
                return t, M
    # TODO(synk): ragged tail could use a masked store instead of jnp.pad.
    tm = min(row_tile, M)
    return tm, pl.cdiv(M, tm) * tm


# ----------------------------- wrapper ------------------------------------- #

def fusion_forward(history, inputs, params, *, row_tile=1024):
    """history, inputs: (B, L, E) float32.  params: packed-weight dict."""
    B, L, E = inputs.shape
    NP = params["w_h"].shape[1]
    M = B * L

    x2 = inputs.reshape(M, E)                       # f32 (used in the blend)
    h2 = history.reshape(M, E)

    tm, Mp = _choose_row_tile(M, row_tile)
    stream_h_bf16 = (tm % 16 == 0)
    if stream_h_bf16:
        h2 = h2.astype(jnp.bfloat16)                # halve h's HBM traffic

    if Mp != M:
        pad = Mp - M
        h2 = jnp.pad(h2, ((0, pad), (0, 0)))
        x2 = jnp.pad(x2, ((0, pad), (0, 0)))

    row_spec = pl.BlockSpec((tm, E), lambda i: (i, 0))
    w_spec = pl.BlockSpec((E, NP), lambda i: (0, 0))    # resident packed weights
    b_spec = pl.BlockSpec((1, NP), lambda i: (0, 0))    # resident packed bias

    # VMEM budget: double-buffered h/x/out row tiles + resident packed weights.
    h_bytes = 2 if stream_h_bf16 else 4
    vmem_bytes = 2 * (tm * E * h_bytes + 2 * tm * E * 4) \
               + 2 * (2 * E * NP * 2 + NP * 4)
    vmem_limit = int(min(64 << 20, max(4 << 20, 2 * vmem_bytes)))

    out = pl.pallas_call(
        _fusion_kernel,
        out_shape=jax.ShapeDtypeStruct((Mp, E), jnp.float32),
        grid_spec=pltpu.PrefetchScalarGridSpec(
            num_scalar_prefetch=0,
            grid=(Mp // tm,),
            in_specs=[row_spec, row_spec, w_spec, w_spec, b_spec],
            out_specs=row_spec,
        ),
        compiler_params=pltpu.CompilerParams(
            dimension_semantics=("parallel",),      # rows independent -> megacore
            vmem_limit_bytes=vmem_limit),
    )(h2, x2, params["w_h"], params["w_x"], params["b"])

    if Mp != M:
        out = out[:M]
    return out.reshape(B, L, E)


# --------------------------- param packing --------------------------------- #

def make_params(wr, br, wg, bg):
    """Pack torch-layout Fusion weights for the kernel.

    wr: (E, 2E) linear_r.weight   br: (E,) linear_r.bias
    wg: (1, 2E) linear_g.weight   bg: (1,) linear_g.bias
    Produces (E, NP) bf16 history/input weight halves whose columns are
    [Wr_* | wg_* | zeros] with NP = round_up(E+1, 128) (pre-transposed so the
    kernel computes rows @ W == torch's cat @ W.T), plus a packed f32 (1, NP)
    bias [br | bg | zeros].
    """
    E = wr.shape[0]
    NP = ((E + 1 + 127) // 128) * 128
    w_h = jnp.zeros((E, NP), jnp.float32)
    w_h = w_h.at[:, :E].set(wr[:, :E].T).at[:, E].set(wg[0, :E])
    w_x = jnp.zeros((E, NP), jnp.float32)
    w_x = w_x.at[:, :E].set(wr[:, E:].T).at[:, E].set(wg[0, E:])
    b = jnp.zeros((1, NP), jnp.float32)
    b = b.at[0, :E].set(br).at[0, E].set(bg[0])
    return {"w_h": w_h.astype(jnp.bfloat16),
            "w_x": w_x.astype(jnp.bfloat16),
            "b": b}


# --------------------------- pure-JAX reference ---------------------------- #

def reference_forward(history, inputs, wr, br, wg, bg):
    """Mirrors the torch module: cat -> linear_r.tanh / linear_g.sigmoid -> mix."""
    cat = jnp.concatenate([history, inputs], axis=-1)        # (B, L, 2E)
    r = jnp.tanh(cat @ wr.T + br)                             # (B, L, E)
    g = jax.nn.sigmoid(cat @ wg.T + bg)                       # (B, L, 1)
    return r * g + inputs * (1.0 - g)


# ------------------------------- main -------------------------------------- #

if __name__ == "__main__":
    B, L, E = 2, 16, 32       # hidden_size = 32; M = 32 -> row tile 16, grid (2,)

    key = jax.random.PRNGKey(0)
    k_h, k_x, k_wr, k_br, k_wg, k_bg = jax.random.split(key, 6)

    history = jax.random.normal(k_h, (B, L, E), dtype=jnp.float32)
    inputs = jax.random.normal(k_x, (B, L, E), dtype=jnp.float32)

    std = 0.1
    wr = jax.random.normal(k_wr, (E, 2 * E), dtype=jnp.float32) * std  # torch layout (out, in)
    br = jax.random.normal(k_br, (E,), dtype=jnp.float32) * std
    wg = jax.random.normal(k_wg, (1, 2 * E), dtype=jnp.float32) * std
    bg = jax.random.normal(k_bg, (1,), dtype=jnp.float32) * std

    params = make_params(wr, br, wg, bg)

    out = fusion_forward(history, inputs, params)
    out = jax.block_until_ready(out)

    ref = reference_forward(history, inputs, wr, br, wg, bg)
    # bf16 MXU operands (f32 accumulate + f32 elementwise) -> slightly looser
    # tolerance than the pure-f32 version.
    np.testing.assert_allclose(np.asarray(out), np.asarray(ref),
                               rtol=2e-2, atol=2e-2)

    print("KERNEL_OK")
</pallas_src>

<mosaic_0001>
module attributes {stable_mosaic.version = 11 : i64} {
  func.func @_fusion_kernel(%arg0: i32, %arg1: memref<16x32xbf16, #tpu.memory_space<vmem>>, %arg2: memref<16x32xf32, #tpu.memory_space<vmem>>, %arg3: memref<32x128xbf16, #tpu.memory_space<vmem>>, %arg4: memref<32x128xbf16, #tpu.memory_space<vmem>>, %arg5: memref<1x128xf32, #tpu.memory_space<vmem>>, %arg6: memref<16x32xf32, #tpu.memory_space<vmem>>) attributes {dimension_semantics = [#tpu.dimension_semantics<parallel>], iteration_bounds = array<i64: 2>, scalar_prefetch = 0 : i64, scratch_operands = 0 : i64, tpu.core_type = #tpu.core_type<tc>, window_params = [{transform_indices = @transform_0, window_bounds = array<i64: 16, 32>}, {transform_indices = @transform_1, window_bounds = array<i64: 16, 32>}, {pipeline_mode = #tpu.pipeline_mode<synchronous>, transform_indices = @transform_2, window_bounds = array<i64: 32, 128>}, {pipeline_mode = #tpu.pipeline_mode<synchronous>, transform_indices = @transform_3, window_bounds = array<i64: 32, 128>}, {pipeline_mode = #tpu.pipeline_mode<synchronous>, transform_indices = @transform_4, window_bounds = array<i64: 1, 128>}, {transform_indices = @transform_5, window_bounds = array<i64: 16, 32>}]} {
    %c0 = arith.constant 0 : index
    %c0_0 = arith.constant 0 : index
    %0 = vector.load %arg2[%c0, %c0_0] : memref<16x32xf32, #tpu.memory_space<vmem>>, vector<16x32xf32>
    %c0_1 = arith.constant 0 : index
    %c0_2 = arith.constant 0 : index
    %1 = vector.load %arg1[%c0_1, %c0_2] : memref<16x32xbf16, #tpu.memory_space<vmem>>, vector<16x32xbf16>
    %2 = arith.truncf %0 : vector<16x32xf32> to vector<16x32xbf16>
    %c0_3 = arith.constant 0 : index
    %c0_4 = arith.constant 0 : index
    %3 = vector.load %arg3[%c0_3, %c0_4] : memref<32x128xbf16, #tpu.memory_space<vmem>>, vector<32x128xbf16>
    %cst = arith.constant dense<0.000000e+00> : vector<16x128xf32>
    %4 = tpu.matmul %1, %3, %cst {dimension_numbers = #tpu.dot_dimension_numbers<[1], [0], [0], [1], [0, 0, 1, 1], [], []>} : vector<16x32xbf16>, vector<32x128xbf16>, vector<16x128xf32> -> vector<16x128xf32>
    %c0_5 = arith.constant 0 : index
    %c0_6 = arith.constant 0 : index
    %5 = vector.load %arg4[%c0_5, %c0_6] : memref<32x128xbf16, #tpu.memory_space<vmem>>, vector<32x128xbf16>
    %cst_7 = arith.constant dense<0.000000e+00> : vector<16x128xf32>
    %6 = tpu.matmul %2, %5, %cst_7 {dimension_numbers = #tpu.dot_dimension_numbers<[1], [0], [0], [1], [0, 0, 1, 1], [], []>} : vector<16x32xbf16>, vector<32x128xbf16>, vector<16x128xf32> -> vector<16x128xf32>
    %7 = arith.addf %4, %6 : vector<16x128xf32>
    %c0_8 = arith.constant 0 : index
    %c0_9 = arith.constant 0 : index
    %8 = vector.load %arg5[%c0_8, %c0_9] : memref<1x128xf32, #tpu.memory_space<vmem>>, vector<1x128xf32>
    %9 = vector.broadcast %8 : vector<1x128xf32> to vector<16x128xf32>
    %10 = arith.addf %7, %9 : vector<16x128xf32>
    %11 = vector.extract_strided_slice %10 {offsets = [0, 0], sizes = [16, 32], strides = [1, 1]} : vector<16x128xf32> to vector<16x32xf32>
    %12 = math.tanh %11 : vector<16x32xf32>
    %13 = vector.extract_strided_slice %10 {offsets = [0, 32], sizes = [16, 1], strides = [1, 1]} : vector<16x128xf32> to vector<16x1xf32>
    %14 = arith.negf %13 : vector<16x1xf32>
    %15 = math.exp %14 : vector<16x1xf32>
    %cst_10 = arith.constant 1.000000e+00 : f32
    %16 = vector.broadcast %cst_10 : f32 to vector<16x1xf32>
    %17 = arith.addf %16, %15 : vector<16x1xf32>
    %18 = arith.divf %16, %17 : vector<16x1xf32>
    %19 = arith.subf %12, %0 : vector<16x32xf32>
    %20 = vector.broadcast %18 : vector<16x1xf32> to vector<16x32xf32>
    %21 = arith.mulf %20, %19 : vector<16x32xf32>
    %22 = arith.addf %0, %21 : vector<16x32xf32>
    %c0_11 = arith.constant 0 : index
    %c0_12 = arith.constant 0 : index
    %23 = vector.load %arg6[%c0_11, %c0_12] : memref<16x32xf32, #tpu.memory_space<vmem>>, vector<16x32xf32>
    tpu.vector_store %arg6[%c0_11, %c0_12], %22 {strides = array<i32>} : memref<16x32xf32, #tpu.memory_space<vmem>>, vector<16x32xf32>,
    return
  }
  func.func @transform_0(%arg0: i32) -> (i32, i32) {
    %c0_i32 = arith.constant 0 : i32
    %c0_i32_0 = arith.constant 0 : i32
    return %arg0, %c0_i32 : i32, i32
  }
  func.func @transform_1(%arg0: i32) -> (i32, i32) {
    %c0_i32 = arith.constant 0 : i32
    %c0_i32_0 = arith.constant 0 : i32
    return %arg0, %c0_i32 : i32, i32
  }
  func.func @transform_2(%arg0: i32) -> (i32, i32) {
    %c0_i32 = arith.constant 0 : i32
    %c0_i32_0 = arith.constant 0 : i32
    %c0_i32_1 = arith.constant 0 : i32
    return %c0_i32, %c0_i32_0 : i32, i32
  }
  func.func @transform_3(%arg0: i32) -> (i32, i32) {
    %c0_i32 = arith.constant 0 : i32
    %c0_i32_0 = arith.constant 0 : i32
    %c0_i32_1 = arith.constant 0 : i32
    return %c0_i32, %c0_i32_0 : i32, i32
  }
  func.func @transform_4(%arg0: i32) -> (i32, i32) {
    %c0_i32 = arith.constant 0 : i32
    %c0_i32_0 = arith.constant 0 : i32
    %c0_i32_1 = arith.constant 0 : i32
    return %c0_i32, %c0_i32_0 : i32, i32
  }
  func.func @transform_5(%arg0: i32) -> (i32, i32) {
    %c0_i32 = arith.constant 0 : i32
    %c0_i32_0 = arith.constant 0 : i32
    return %arg0, %c0_i32 : i32, i32
  }
}

</mosaic_0001>

<llo_original>
// kernel: tpu_custom_call.1
$region0: #{tpu_custom_call.1}
  #allocation0 [shape = 'u32[]', space=smem, size = 0x4, offset = 0x4, fixed_abs, tag = 'smem constant byte address 0x4 - core index']
  #allocation1 [shape = 'u32[72,128]{1,0:T(1,128)}', space=vmem, size = 0x9000, scoped, tag = 'internal scratch']
  %s0 = inlined_call_operand.hbm [shape: bf16[32,32], index: 0, kind: input, shape index: {}]
  %s1 = inlined_call_operand.hbm [shape: f32[32,32], index: 1, kind: input, shape index: {}]
  %s2 = inlined_call_operand.hbm [shape: bf16[32,128], index: 2, kind: input, shape index: {}]
  %s3 = inlined_call_operand.hbm [shape: bf16[32,128], index: 3, kind: input, shape index: {}]
  %s4 = inlined_call_operand.vmem [shape: f32[1,128], index: 4, kind: input, shape index: {}]
  %s5 = inlined_call_operand.hbm [shape: f32[32,32], index: 5, kind: output, shape index: {}]
  %s6 = sld [smem:[#allocation0]]
  $region69: #{tpu_custom_call.1} parent=0
    _
  %s8 = ssub.s32 1, %s6
  %s9 = scalar_select 0, %s8, %s6
  $region1: #{tpu_custom_call.1} parent=0
    #allocation2 [shape = 'u8[8192]{0}', space=vmem, size = 0x2000, scoped, tag = 'input window, operand 0']
    #allocation3 [shape = 's32[2]{0}', space=sflag, size = 0x8, scoped, tag = 'scoped memory for tpu_custom_call.1']
    #allocation4 [shape = 's32[2]{0}', space=sflag, size = 0x8, scoped, tag = 'scoped memory for tpu_custom_call.1']
    #allocation5 [shape = 'u8[16384]{0}', space=vmem, size = 0x4000, scoped, tag = 'input window, operand 1']
    #allocation6 [shape = 's32[2]{0}', space=sflag, size = 0x8, scoped, tag = 'scoped memory for tpu_custom_call.1']
    #allocation7 [shape = 'u8[8192]{0}', space=vmem, size = 0x2000, scoped, tag = 'input window, operand 2, single buffered']
    #allocation8 [shape = 'u8[8192]{0}', space=vmem, size = 0x2000, scoped, tag = 'input window, operand 3, single buffered']
    #allocation9 [shape = 's32[1]{0}', space=sflag, size = 0x4, scoped, tag = 'scoped memory for tpu_custom_call.1']
    #allocation10 [shape = 'u8[16384]{0}', space=vmem, size = 0x4000, scoped, tag = 'output window, operand 0']
    %10 = vsyncpa [#allocation3], 0
    %s11 = scalar_lea.sflag [#allocation3], 1
    %12 = vsyncpa %s11, 0
    %13 = vsyncpa [#allocation6], 0
    %s14 = scalar_lea.sflag [#allocation6], 1
    %15 = vsyncpa %s14, 0
    %16 = vsyncpa [#allocation9], 0
    %17 = vsyncpa [#allocation4], 0
    %s18 = scalar_lea.sflag [#allocation4], 1
    %19 = vsyncpa %s18, 0
    loop: start=0, step=1, limit=4
    $region2: #{tpu_custom_call.1} parent=1 // loop_pre_header
      _
    $region3: #{tpu_custom_call.1} parent=1 // loop_header
      %s21 = sphi 0, %s25
      %p22 = scmp.ge.s32.totalorder %s21, 4
      %s31 = sphi 0, %s33
      %s34 = sphi 0, %s31
      %s35 = sphi 0, %s34
      %s51 = sphi 0, %s35
      %s57 = sphi 0, %s59
      %s60 = sphi 0, %s57
      %s61 = sphi 0, %s60
      %s77 = sphi 0, %s61
      %s81 = sphi 0, %s81
      %s83 = sphi 0, %s81
      %s84 = sphi 0, %s83
      %s98 = sphi 0, %s84
      %s102 = sphi 0, %s102
      %s104 = sphi 0, %s102
      %s105 = sphi 0, %s104
      %s119 = sphi 0, %s105
      %s123 = sphi 0, %s123
      %s125 = sphi 0, %s123
      %s126 = sphi 0, %s125
      %s140 = sphi 0, %s126
      %s146 = sphi 0, %s148
      %s149 = sphi 0, %s146
      %s150 = sphi 0, %s149
      %s166 = sphi 0, %s150
    $region4: #{tpu_custom_call.1} parent=1 // loop_header_branch
      %24 = sbr.rel (%p22) target = $region8
    $region5: #{tpu_custom_call.1} parent=1 // loop_body
      %s26 = ssub.s32 %s21, 1
      %s27 = ssub.s32 %s21, 2
      %s28 = sadd.s32 %s21, 1
      %s29 = ssub.s32 %s21, %s28
      %p30 = scmp.eq.s32.totalorder %s29, 0
      %s32 = sadd.s32 %s31, 1
      %s33 = scalar_select %p30, %s31, %s32
      %p36 = pneg %p30
      %p37 = scmp.eq.s32.totalorder %s21, 1
      %p38 = por %p36, %p37
      %p39 = scmp.ne.s32.totalorder %s31, %s34
      %p40 = scmp.eq.s32.totalorder %s21, 0
      %p41 = por %p39, %p40
      %p42 = scmp.ne.s32.totalorder %s31, %s34
      %p43 = scmp.eq.s32.totalorder %s26, 1
      %p44 = por %p42, %p43
      %p45 = scmp.ne.s32.totalorder %s34, %s35
      %p46 = scmp.eq.s32.totalorder %s26, 0
      %p47 = por %p45, %p46
      %p48 = scmp.ne.s32.totalorder %s34, %s35
      %p49 = scmp.eq.s32.totalorder %s27, 1
      %p50 = por %p48, %p49
      %p52 = scmp.ne.s32.totalorder %s35, %s51
      %p53 = scmp.eq.s32.totalorder %s27, 0
      %p54 = por %p52, %p53
      %s55 = ssub.s32 %s21, %s28
      %p56 = scmp.eq.s32.totalorder %s55, 0
      %s58 = sadd.s32 %s57, 1
      %s59 = scalar_select %p56, %s57, %s58
      %p62 = pneg %p56
      %p63 = scmp.eq.s32.totalorder %s21, 1
      %p64 = por %p62, %p63
      %p65 = scmp.ne.s32.totalorder %s57, %s60
      %p66 = scmp.eq.s32.totalorder %s21, 0
      %p67 = por %p65, %p66
      %p68 = scmp.ne.s32.totalorder %s57, %s60
      %p69 = scmp.eq.s32.totalorder %s26, 1
      %p70 = por %p68, %p69
      %p71 = scmp.ne.s32.totalorder %s60, %s61
      %p72 = scmp.eq.s32.totalorder %s26, 0
      %p73 = por %p71, %p72
      %p74 = scmp.ne.s32.totalorder %s60, %s61
      %p75 = scmp.eq.s32.totalorder %s27, 1
      %p76 = por %p74, %p75
      %p78 = scmp.ne.s32.totalorder %s61, %s77
      %p79 = scmp.eq.s32.totalorder %s27, 0
      %p80 = por %p78, %p79
      %s82 = sadd.s32 %s81, 1
      %p85 = scmp.eq.s32.totalorder %s21, 1
      %p86 = scmp.ne.s32.totalorder %s81, %s83
      %p87 = scmp.eq.s32.totalorder %s21, 0
      %p88 = por %p86, %p87
      %p89 = scmp.ne.s32.totalorder %s81, %s83
      %p90 = scmp.eq.s32.totalorder %s26, 1
      %p91 = por %p89, %p90
      %p92 = scmp.ne.s32.totalorder %s83, %s84
      %p93 = scmp.eq.s32.totalorder %s26, 0
      %p94 = por %p92, %p93
      %p95 = scmp.ne.s32.totalorder %s83, %s84
      %p96 = scmp.eq.s32.totalorder %s27, 1
      %p97 = por %p95, %p96
      %p99 = scmp.ne.s32.totalorder %s84, %s98
      %p100 = scmp.eq.s32.totalorder %s27, 0
      %p101 = por %p99, %p100
      %s103 = sadd.s32 %s102, 1
      %p106 = scmp.eq.s32.totalorder %s21, 1
      %p107 = scmp.ne.s32.totalorder %s102, %s104
      %p108 = scmp.eq.s32.totalorder %s21, 0
      %p109 = por %p107, %p108
      %p110 = scmp.ne.s32.totalorder %s102, %s104
      %p111 = scmp.eq.s32.totalorder %s26, 1
      %p112 = por %p110, %p111
      %p113 = scmp.ne.s32.totalorder %s104, %s105
      %p114 = scmp.eq.s32.totalorder %s26, 0
      %p115 = por %p113, %p114
      %p116 = scmp.ne.s32.totalorder %s104, %s105
      %p117 = scmp.eq.s32.totalorder %s27, 1
      %p118 = por %p116, %p117
      %p120 = scmp.ne.s32.totalorder %s105, %s119
      %p121 = scmp.eq.s32.totalorder %s27, 0
      %p122 = por %p120, %p121
      %s124 = sadd.s32 %s123, 1
      %p127 = scmp.eq.s32.totalorder %s21, 1
      %p128 = scmp.ne.s32.totalorder %s123, %s125
      %p129 = scmp.eq.s32.totalorder %s21, 0
      %p130 = por %p128, %p129
      %p131 = scmp.ne.s32.totalorder %s123, %s125
      %p132 = scmp.eq.s32.totalorder %s26, 1
      %p133 = por %p131, %p132
      %p134 = scmp.ne.s32.totalorder %s125, %s126
      %p135 = scmp.eq.s32.totalorder %s26, 0
      %p136 = por %p134, %p135
      %p137 = scmp.ne.s32.totalorder %s125, %s126
      %p138 = scmp.eq.s32.totalorder %s27, 1
      %p139 = por %p137, %p138
      %p141 = scmp.ne.s32.totalorder %s126, %s140
      %p142 = scmp.eq.s32.totalorder %s27, 0
      %p143 = por %p141, %p142
      %s144 = ssub.s32 %s21, %s28
      %p145 = scmp.eq.s32.totalorder %s144, 0
      %s147 = sadd.s32 %s146, 1
      %s148 = scalar_select %p145, %s146, %s147
      %p151 = pneg %p145
      %p152 = scmp.eq.s32.totalorder %s21, 1
      %p153 = por %p151, %p152
      %p154 = scmp.ne.s32.totalorder %s146, %s149
      %p155 = scmp.eq.s32.totalorder %s21, 0
      %p156 = por %p154, %p155
      %p157 = scmp.ne.s32.totalorder %s146, %s149
      %p158 = scmp.eq.s32.totalorder %s26, 1
      %p159 = por %p157, %p158
      %p160 = scmp.ne.s32.totalorder %s149, %s150
      %p161 = scmp.eq.s32.totalorder %s26, 0
      %p162 = por %p160, %p161
      %p163 = scmp.ne.s32.totalorder %s149, %s150
      %p164 = scmp.eq.s32.totalorder %s27, 1
      %p165 = por %p163, %p164
      %p167 = scmp.ne.s32.totalorder %s150, %s166
      %p168 = scmp.eq.s32.totalorder %s27, 0
      %p169 = por %p167, %p168
      %p170 = scmp.le.s32.totalorder 1, %s21
      %p171 = scmp.lt.s32.totalorder %s21, 3
      %p172 = pnand %p170, %p171
      %p173 = pneg %p172
      // Predicated region
      $region9: #{tpu_custom_call.1} parent=5 // pred_check
        _
      $region10: #{tpu_custom_call.1} parent=5 // pred_check_branch
        %175 = sbr.rel (%p172) target = $region12
      $region11: #{tpu_custom_call.1} parent=5 // pred_region
        %s176 = ssub.s32 %s21, 1
        // Predicated region
        $region13: #{tpu_custom_call.1} parent=11 // pred_check
          %p177 = pneg %p94
        $region14: #{tpu_custom_call.1} parent=11 // pred_check_branch
          %179 = sbr.rel (%p177) target = $region16
        $region15: #{tpu_custom_call.1} parent=11 // pred_region
          %181 = vsyncadd [#allocation6], 0
          %s182 = sshll.u32 %s2, 4
          %s183 = int_to_ptr.hbm [resolvable:$true] %s182
          %s184 = sshll.u32 [#allocation7], 4
          %s185 = int_to_ptr.vmem [resolvable:$true] %s184
          %190 = dma.hbm_to_vmem [thread:$0]  %s183, 256, %s185, [#allocation6], 64, 64, 4
        $region16: #{tpu_custom_call.1} parent=11 // pred_fallthru
          _
        // Predicated region
        $region17: #{tpu_custom_call.1} parent=11 // pred_check
          %p191 = pneg %p115
        $region18: #{tpu_custom_call.1} parent=11 // pred_check_branch
          %193 = sbr.rel (%p191) target = $region20
        $region19: #{tpu_custom_call.1} parent=11 // pred_region
          %195 = vsyncadd [#allocation9], 0
          %s196 = sshll.u32 %s3, 4
          %s197 = int_to_ptr.hbm [resolvable:$true] %s196
          %s198 = sshll.u32 [#allocation8], 4
          %s199 = int_to_ptr.vmem [resolvable:$true] %s198
          %204 = dma.hbm_to_vmem [thread:$0]  %s197, 256, %s199, [#allocation9], 64, 64, 4
        $region20: #{tpu_custom_call.1} parent=11 // pred_fallthru
          _
        // Predicated region
        $region21: #{tpu_custom_call.1} parent=11 // pred_check
          %p205 = pneg %p136
        $region22: #{tpu_custom_call.1} parent=11 // pred_check_branch
          %207 = sbr.rel (%p205) target = $region24
        $region23: #{tpu_custom_call.1} parent=11 // pred_region
          _
        $region24: #{tpu_custom_call.1} parent=11 // pred_fallthru
          _
      $region12: #{tpu_custom_call.1} parent=5 // pred_fallthru
        _
      %p208 = scmp.lt.s32.totalorder %s21, 2
      // Predicated region
      $region25: #{tpu_custom_call.1} parent=5 // pred_check
        %p209 = pneg %p208
      $region26: #{tpu_custom_call.1} parent=5 // pred_check_branch
        %211 = sbr.rel (%p209) target = $region28
      $region27: #{tpu_custom_call.1} parent=5 // pred_region
        // Predicated region
        $region29: #{tpu_custom_call.1} parent=27 // pred_check
          %p212 = pneg %p41
        $region30: #{tpu_custom_call.1} parent=27 // pred_check_branch
          %214 = sbr.rel (%p212) target = $region32
        $region31: #{tpu_custom_call.1} parent=27 // pred_region
          %s215 = sand.u32 %s31, 1
          %s216 = scalar_lea.sflag [#allocation3], %s215
          %s217 = sand.u32 %s31, 1
          %s218 = smul.addr %s217, 8
          %s219 = scalar_lea.vmem [#allocation2], %s218
          %s220 = smul.u32 2, %s21
          %222 = vsyncadd %s216, 0
          %s223 = smul.addr %s220, 4
          %s224 = scalar_lea.hbm %s0, %s223
          %s225 = sshll.u32 %s224, 4
          %s226 = int_to_ptr.hbm [resolvable:$true] %s225
          %s227 = sshll.u32 %s219, 4
          %s228 = int_to_ptr.vmem [resolvable:$true] %s227
          %233 = dma.hbm_to_vmem [thread:$0]  %s226, 128, %s228, %s216, 64, 64, 4
        $region32: #{tpu_custom_call.1} parent=27 // pred_fallthru
          _
        // Predicated region
        $region33: #{tpu_custom_call.1} parent=27 // pred_check
          %p234 = pneg %p67
        $region34: #{tpu_custom_call.1} parent=27 // pred_check_branch
          %236 = sbr.rel (%p234) target = $region36
        $region35: #{tpu_custom_call.1} parent=27 // pred_region
          %s237 = sand.u32 %s21, 1
          %s238 = scalar_lea.sflag [#allocation6], %s237
          %s239 = sand.u32 %s57, 1
          %s240 = smul.addr %s239, 16
          %s241 = scalar_lea.vmem [#allocation5], %s240
          %s242 = smul.u32 2, %s21
          %244 = vsyncadd %s238, 0
          %s245 = smul.addr %s242, 8
          %s246 = scalar_lea.hbm %s1, %s245
          %s247 = sshll.u32 %s246, 4
          %s248 = int_to_ptr.hbm [resolvable:$true] %s247
          %s249 = sshll.u32 %s241, 4
          %s250 = int_to_ptr.vmem [resolvable:$true] %s249
          %255 = dma.hbm_to_vmem [thread:$0]  %s248, 256, %s250, %s238, 128, 128, 8
        $region36: #{tpu_custom_call.1} parent=27 // pred_fallthru
          _
      $region28: #{tpu_custom_call.1} parent=5 // pred_fallthru
        _
      %p256 = scmp.le.s32.totalorder 1, %s21
      %p257 = scmp.lt.s32.totalorder %s21, 3
      %p258 = pnand %p256, %p257
      %p259 = pneg %p258
      // Predicated region
      $region37: #{tpu_custom_call.1} parent=5 // pred_check
        _
      $region38: #{tpu_custom_call.1} parent=5 // pred_check_branch
        %261 = sbr.rel (%p258) target = $region40
      $region39: #{tpu_custom_call.1} parent=5 // pred_region
        %s262 = ssub.s32 %s21, 1
        %s263 = sand.u32 %s34, 1
        %s264 = scalar_lea.sflag [#allocation3], %s263
        %s265 = sand.u32 %s34, 1
        %s266 = smul.addr %s265, 8
        %s267 = scalar_lea.vmem [#allocation2], %s266
        // Predicated region
        $region41: #{tpu_custom_call.1} parent=39 // pred_check
          %p268 = pneg %p47
        $region42: #{tpu_custom_call.1} parent=39 // pred_check_branch
          %270 = sbr.rel (%p268) target = $region44
        $region43: #{tpu_custom_call.1} parent=39 // pred_region
          %272 = dma.done %s264, 128
        $region44: #{tpu_custom_call.1} parent=39 // pred_fallthru
          _
        %s273 = sand.u32 %s26, 1
        %s274 = scalar_lea.sflag [#allocation6], %s273
        %s275 = sand.u32 %s60, 1
        %s276 = smul.addr %s275, 16
        %s277 = scalar_lea.vmem [#allocation5], %s276
        // Predicated region
        $region45: #{tpu_custom_call.1} parent=39 // pred_check
          %p278 = pneg %p73
        $region46: #{tpu_custom_call.1} parent=39 // pred_check_branch
          %280 = sbr.rel (%p278) target = $region48
        $region47: #{tpu_custom_call.1} parent=39 // pred_region
          %282 = dma.done %s274, 256
        $region48: #{tpu_custom_call.1} parent=39 // pred_fallthru
          _
        // Predicated region
        $region49: #{tpu_custom_call.1} parent=39 // pred_check
          %p283 = pneg %p94
        $region50: #{tpu_custom_call.1} parent=39 // pred_check_branch
          %285 = sbr.rel (%p283) target = $region52
        $region51: #{tpu_custom_call.1} parent=39 // pred_region
          %287 = dma.done [#allocation6], 256
        $region52: #{tpu_custom_call.1} parent=39 // pred_fallthru
          _
        // Predicated region
        $region53: #{tpu_custom_call.1} parent=39 // pred_check
          %p288 = pneg %p115
        $region54: #{tpu_custom_call.1} parent=39 // pred_check_branch
          %290 = sbr.rel (%p288) target = $region56
        $region55: #{tpu_custom_call.1} parent=39 // pred_region
          %292 = dma.done [#allocation9], 256
        $region56: #{tpu_custom_call.1} parent=39 // pred_fallthru
          _
        %s293 = sand.u32 %s34, 1
        %s294 = scalar_lea.sflag [#allocation3], %s293
        %s295 = sand.u32 %s34, 1
        %s296 = smul.addr %s295, 8
        %s297 = scalar_lea.vmem [#allocation2], %s296
        %p298 = pneg %p47
        %p299 = pneg %p44
        %s300 = sand.u32 %s26, 1
        %s301 = scalar_lea.sflag [#allocation6], %s300
        %s302 = sand.u32 %s60, 1
        %s303 = smul.addr %s302, 16
        %s304 = scalar_lea.vmem [#allocation5], %s303
        %p305 = pneg %p73
        %p306 = pneg %p70
        %p307 = pneg %p94
        %p308 = pneg %p91
        %p309 = pneg %p115
        %p310 = pneg %p112
        %p311 = pneg %p136
        %p312 = pneg %p133
        %p313 = pneg %p162
        %p314 = pneg %p159
        %s315 = sand.u32 %s149, 1
        %s316 = scalar_lea.sflag [#allocation4], %s315
        %s317 = sand.u32 %s149, 1
        %s318 = smul.addr %s317, 16
        %s319 = scalar_lea.vmem [#allocation10], %s318
        %s320 = smul.u32 2, %s26
        %s321 = smul.u32 2, %s26
        %s322 = smul.u32 2, %s26
        %v324 = vld [vmem:[%s277] sm:$0xff]
        %v325 = vld [vmem:[%s277 + $0x8] sm:$0xff]
        %v326 = vld [vmem:[%s267] sm:$0xf]
        %v327 = vld [vmem:[%s267 + $0x4] sm:$0xf]
        %v328 = vpack.c.bf16 %v325, %v324
        %v329 = vld [vmem:[#allocation7] sm:$0xf]
        %v330 = vld [vmem:[#allocation7 + $0x4] sm:$0xf]
        %v331 = vld [vmem:[#allocation7 + $0x8] sm:$0xf]
        %v332 = vld [vmem:[#allocation7 + $0xc] sm:$0xf]
        %v333 = vld [vmem:[#allocation8] sm:$0xf]
        %v334 = vld [vmem:[#allocation8 + $0x4] sm:$0xf]
        %v335 = vld [vmem:[#allocation8 + $0x8] sm:$0xf]
        %v336 = vld [vmem:[#allocation8 + $0xc] sm:$0xf]
        %v341 = vunpack.c.l.b16 %v333
        %v342 = vunpack.c.l.b16 %v334
        %v343 = vunpack.c.l.b16 %v335
        %v344 = vunpack.c.l.b16 %v336
        %v345 = vpack.c.b16 %v342, %v341
        %v346 = vpack.c.b16 %v344, %v343
        %vm349 = vcmask 261120
        %v351 = vsel %vm349, %v328, 0
        %353 = vmatpush.bf16.msra.mxu0 0
        %354 = vmatpush.bf16.msra.mxu0 0
        %355 = vmatpush.bf16.msra.mxu0 0
        %356 = vmatpush.bf16.msra.mxu0 0
        %357 = vmatpush.bf16.msra.mxu0 0
        %358 = vmatpush.bf16.msra.mxu0 0
        %359 = vmatpush.bf16.msra.mxu0 %v346
        %360 = vmatpush.bf16.msra.mxu0 %v345
        %361 = vmatmul.bf16.gmra.mxu0 %v351
        %v362 = vpop.f32.mrf.mxu0
        %v363 = vadd.f32 0.0, %v362
        %v364 = vpop.f32.mrf.mxu0
        %v365 = vadd.f32 0.0, %v364
        %366 = vdwg.mxu0
        %v369 = vunpack.c.l.b16 %v326
        %v370 = vunpack.c.l.b16 %v327
        %v371 = vpack.c.b16 %v370, %v369
        %v376 = vunpack.c.l.b16 %v329
        %v377 = vunpack.c.l.b16 %v330
        %v378 = vunpack.c.l.b16 %v331
        %v379 = vunpack.c.l.b16 %v332
        %v380 = vpack.c.b16 %v377, %v376
        %v381 = vpack.c.b16 %v379, %v378
        %v385 = vsel %vm349, %v371, 0
        %387 = vmatpush.bf16.msra.mxu0 0
        %388 = vmatpush.bf16.msra.mxu0 0
        %389 = vmatpush.bf16.msra.mxu0 0
        %390 = vmatpush.bf16.msra.mxu0 0
        %391 = vmatpush.bf16.msra.mxu0 0
        %392 = vmatpush.bf16.msra.mxu0 0
        %393 = vmatpush.bf16.msra.mxu0 %v381
        %394 = vmatpush.bf16.msra.mxu0 %v380
        %395 = vmatmul.bf16.gmra.mxu0 %v385
        %v396 = vpop.f32.mrf.mxu0
        %v397 = vadd.f32 %v363, %v396
        %v398 = vpop.f32.mrf.mxu0
        %v399 = vadd.f32 %v365, %v398
        %400 = vdwg.mxu0
        %v401 = vld [vmem:[%s4] sm:$0x1]
        %v403 = vperm.slane %v401, 0
        %v405 = vadd.f32 %v397, %v403
        %v406 = vadd.f32 %v399, %v403
        %v407 = vtanh.pop %v405
        %v408 = vtanh.pop %v406
        %v409 = vxor.u32 %v405, 2147483648
        %v410 = vxor.u32 %v406, 2147483648
        %v411 = vmul.f32 %v409, 1.442695
        %v412 = vpow.pop %v411
        %v413 = vmul.f32 %v410, 1.442695
        %v414 = vpow.pop %v413
        %v415 = vadd.f32 %v412, 1.0
        %v416 = vadd.f32 %v414, 1.0
        %v417 = vrcp.pop %v415
        %v418 = vmul.f32 %v415, %v417
        %v419 = vsub.f32 1.0, %v418
        %v420 = vmul.f32 %v417, %v419
        %v421 = vadd.f32 %v417, %v420
        %vm422 = vweird.f32 %v415
        %vm423 = vweird.f32 %v417
        %vm424 = vmor %vm422, %vm423
        %v425 = vsel %vm424, %v417, %v421
        %v426 = vand.u32 2147483647, %v415
        %vm427 = vcmp.eq.f32.partialorder %v426, 8.507059e+37
        %v428 = vand.u32 %v415, 2147483648
        %v429 = vor.u32 1.1754944e-38, %v428
        %v430 = vsel %vm427, %v429, %v425
        %v431 = vmul.f32 1.0, %v430
        %v432 = vrcp.pop %v416
        %v433 = vmul.f32 %v416, %v432
        %v434 = vsub.f32 1.0, %v433
        %v435 = vmul.f32 %v432, %v434
        %v436 = vadd.f32 %v432, %v435
        %vm437 = vweird.f32 %v416
        %vm438 = vweird.f32 %v432
        %vm439 = vmor %vm437, %vm438
        %v440 = vsel %vm439, %v432, %v436
        %v441 = vand.u32 2147483647, %v416
        %vm442 = vcmp.eq.f32.partialorder %v441, 8.507059e+37
        %v443 = vand.u32 %v416, 2147483648
        %v444 = vor.u32 1.1754944e-38, %v443
        %v445 = vsel %vm442, %v444, %v440
        %v446 = vmul.f32 1.0, %v445
        %v447 = vsub.f32 %v407, %v324
        %v448 = vsub.f32 %v408, %v325
        %450 = vset.pattern.permute.xlu0 32
        %451 = vperm.xlu0 %450, %v431
        %v452 = vpop.permute.xlu0 %451
        %455 = vset.pattern.permute.xlu0 32
        %456 = vperm.xlu0 %455, %v446
        %v457 = vpop.permute.xlu0 %456
        %v459 = vmul.f32 %v452, %v447
        %v460 = vmul.f32 %v457, %v448
        %v461 = vadd.f32 %v324, %v459
        %v462 = vadd.f32 %v325, %v460
        %463 = vst.msk [vmem:[%s319] sm:$0xff] %vm349, %v461
        %464 = vst.msk [vmem:[%s319 + $0x8] sm:$0xff] %vm349, %v462
        %s465 = sand.u32 %s149, 1
        %s466 = scalar_lea.sflag [#allocation4], %s465
        %s467 = sand.u32 %s149, 1
        %s468 = smul.addr %s467, 16
        %s469 = scalar_lea.vmem [#allocation10], %s468
        // Predicated region
        $region57: #{tpu_custom_call.1} parent=39 // pred_check
          %p470 = pneg %p159
        $region58: #{tpu_custom_call.1} parent=39 // pred_check_branch
          %472 = sbr.rel (%p470) target = $region60
        $region59: #{tpu_custom_call.1} parent=39 // pred_region
          %s473 = smul.u32 2, %s26
          %475 = vsyncadd %s466, 0
          %s476 = smul.addr %s473, 8
          %s477 = scalar_lea.hbm %s5, %s476
          %s478 = sshll.u32 %s469, 4
          %s479 = int_to_ptr.vmem [resolvable:$true] %s478
          %s480 = sshll.u32 %s477, 4
          %s481 = int_to_ptr.hbm [resolvable:$true] %s480
          %486 = dma.vmem_to_hbm [thread:$0]  %s479, 256, %s481, %s466, 128, 128, 8
        $region60: #{tpu_custom_call.1} parent=39 // pred_fallthru
          _
      $region40: #{tpu_custom_call.1} parent=5 // pred_fallthru
        _
      %p487 = scmp.le.s32.totalorder 2, %s21
      // Predicated region
      $region61: #{tpu_custom_call.1} parent=5 // pred_check
        %p488 = pneg %p487
      $region62: #{tpu_custom_call.1} parent=5 // pred_check_branch
        %490 = sbr.rel (%p488) target = $region64
      $region63: #{tpu_custom_call.1} parent=5 // pred_region
        %s491 = ssub.s32 %s21, 2
        // Predicated region
        $region65: #{tpu_custom_call.1} parent=63 // pred_check
          %p492 = pneg %p165
        $region66: #{tpu_custom_call.1} parent=63 // pred_check_branch
          %494 = sbr.rel (%p492) target = $region68
        $region67: #{tpu_custom_call.1} parent=63 // pred_region
          %s495 = sand.u32 %s150, 1
          %s496 = scalar_lea.sflag [#allocation4], %s495
          %s497 = sand.u32 %s150, 1
          %s498 = smul.addr %s497, 16
          %s499 = scalar_lea.vmem [#allocation10], %s498
          %501 = dma.done %s496, 256
        $region68: #{tpu_custom_call.1} parent=63 // pred_fallthru
          _
      $region64: #{tpu_custom_call.1} parent=5 // pred_fallthru
        _
    $region6: #{tpu_custom_call.1} parent=1 // loop_footer
      %s25 = sadd.s32 1, %s21
    $region7: #{tpu_custom_call.1} parent=1 // loop_footer_branch
      %20 = sbr.rel target = $region3
    $region8: #{tpu_custom_call.1} parent=1 // loop_exit
      _
    %502 = vsyncpa [#allocation3], 1
    %s503 = scalar_lea.sflag [#allocation3], 1
    %504 = vsyncpa %s503, 1
    %505 = vsyncpa [#allocation6], 1
    %s506 = scalar_lea.sflag [#allocation6], 1
    %507 = vsyncpa %s506, 1
    %508 = vsyncpa [#allocation9], 1
    %509 = vsyncpa [#allocation4], 1
    %s510 = scalar_lea.sflag [#allocation4], 1
    %511 = vsyncpa %s510, 1

</llo_original>
